<compile_context>
chip_gen: v7x
topology: tpu7x:2x2x1
jax: 0.10.0
libtpu: 0.0.40
codegen_flags: <defaults>
</compile_context>

<pallas_src>
import jax
import jax.numpy as jnp
from jax.experimental import pallas as pl
from jax.experimental.pallas import tpu as pltpu

_LANE_WIDTHS = (1024, 512, 256, 128)   # lane-dense candidates (multiples of 128)
_SUBLANE = 32                          # sublane multiple safe for every dtype (f32..int8)
_TARGET_TILE_BYTES = 8 * 1024 * 1024   # ~8 MiB per input tile


def _leaky_relu_kernel(alpha_ref, x_ref, o_ref):
    x = x_ref[...]
    slope = alpha_ref[0].astype(x.dtype)
    o_ref[...] = jnp.where(x >= 0, x, x * slope)


def pg_leaky_relu_forward(x, alpha=0.2):
    """LeakyReLU with negative_slope=alpha, matching PGLeakyReLU.forward.

    Works for any input shape/dtype; internally viewed as a (rows, lane_w)
    lane-dense slab with no data movement for the common case.
    """
    orig_shape = x.shape
    dtype = x.dtype
    total = x.size
    if total == 0:
        return x
    itemsize = x.dtype.itemsize

    # Widest lane-dense last dim that divides the element count -> no pad/slice.
    lane_w = next((w for w in _LANE_WIDTHS if total % w == 0), None)

    flat = x.reshape(-1)
    padded = False
    if lane_w is None:
        # TODO(synk): element counts not divisible by 128 still take a
        # pad + slice fallback (one extra HBM pass each); a fully copy-free
        # path would need a tiny separate op for the <128-element tail.
        lane_w = 128
        rows = pl.cdiv(total, lane_w)
        flat = jnp.pad(flat, (0, rows * lane_w - total))
        padded = True
    else:
        rows = total // lane_w

    x2 = flat.reshape(rows, lane_w)

    # ~8 MiB tiles, sublane-aligned; guarantee >=2 grid steps for megacore
    # sharding when the input is big enough.  Ragged final block is fine.
    target_rows = max(_SUBLANE,
                      (_TARGET_TILE_BYTES // (lane_w * itemsize)) // _SUBLANE * _SUBLANE)
    if rows < 2 * _SUBLANE:
        tile_rows = rows                       # single full-extent block
    else:
        half = (rows // 2) // _SUBLANE * _SUBLANE
        tile_rows = max(_SUBLANE, min(target_rows, half))
    grid = (pl.cdiv(rows, tile_rows),)

    alpha_arr = jnp.asarray([alpha], dtype=jnp.float32)

    out = pl.pallas_call(
        _leaky_relu_kernel,
        out_shape=jax.ShapeDtypeStruct((rows, lane_w), dtype),
        grid_spec=pltpu.PrefetchScalarGridSpec(
            num_scalar_prefetch=0,
            grid=grid,
            in_specs=[
                pl.BlockSpec(memory_space=pltpu.MemorySpace.SMEM),    # alpha scalar
                pl.BlockSpec((tile_rows, lane_w), lambda i: (i, 0)),  # x tile
            ],
            out_specs=pl.BlockSpec((tile_rows, lane_w), lambda i: (i, 0)),
        ),
        compiler_params=pltpu.CompilerParams(
            dimension_semantics=("parallel",),
            vmem_limit_bytes=48 * 1024 * 1024,
        ),
        cost_estimate=pl.CostEstimate(
            flops=rows * lane_w,
            transcendentals=0,
            bytes_accessed=2 * rows * lane_w * itemsize,
        ),
    )(alpha_arr, x2)

    if padded:
        out = out.reshape(-1)[:total]
    return out.reshape(orig_shape)


if __name__ == "__main__":
    key = jax.random.PRNGKey(0)
    alpha = 0.2

    # Primary shape from the module's typical use (NCHW activation).
    N, C, H, W = 2, 4, 16, 16
    x = jax.random.normal(key, (N, C, H, W), dtype=jnp.float32)
    y = jax.block_until_ready(pg_leaky_relu_forward(x, alpha=alpha))
    ref = jnp.where(x >= 0, x, alpha * x)
    assert y.shape == x.shape and y.dtype == x.dtype
    assert jnp.allclose(y, ref, atol=1e-6, rtol=1e-6)

    # Multi-block path with a ragged final block (rows=70, tile_rows=32, grid=3).
    k2 = jax.random.fold_in(key, 1)
    x2 = jax.random.normal(k2, (7, 10, 32, 32), dtype=jnp.float32)
    y2 = jax.block_until_ready(pg_leaky_relu_forward(x2, alpha=alpha))
    assert jnp.allclose(y2, jnp.where(x2 >= 0, x2, alpha * x2), atol=1e-6, rtol=1e-6)

    # Pad-fallback path (element count not divisible by 128).
    k3 = jax.random.fold_in(key, 2)
    x3 = jax.random.normal(k3, (2, 3, 5, 7), dtype=jnp.float32)
    y3 = jax.block_until_ready(pg_leaky_relu_forward(x3, alpha=alpha))
    assert jnp.allclose(y3, jnp.where(x3 >= 0, x3, alpha * x3), atol=1e-6, rtol=1e-6)

    print("KERNEL_OK")
</pallas_src>

<mosaic_0001>
module attributes {stable_mosaic.version = 11 : i64} {
  func.func @_leaky_relu_kernel(%arg0: i32, %arg1: memref<1xf32, #tpu.memory_space<smem>>, %arg2: memref<2x1024xf32, #tpu.memory_space<vmem>>, %arg3: memref<2x1024xf32, #tpu.memory_space<vmem>>) attributes {dimension_semantics = [#tpu.dimension_semantics<parallel>], iteration_bounds = array<i64: 1>, scalar_prefetch = 0 : i64, scratch_operands = 0 : i64, tpu.core_type = #tpu.core_type<tc>, window_params = [{transform_indices = @transform_0, window_bounds = array<i64: 1>}, {transform_indices = @transform_1, window_bounds = array<i64: 2, 1024>}, {transform_indices = @transform_2, window_bounds = array<i64: 2, 1024>}]} {
    %c0 = arith.constant 0 : index
    %c0_0 = arith.constant 0 : index
    %0 = vector.load %arg2[%c0, %c0_0] : memref<2x1024xf32, #tpu.memory_space<vmem>>, vector<2x1024xf32>
    %c0_1 = arith.constant 0 : index
    %1 = memref.load %arg1[%c0_1] : memref<1xf32, #tpu.memory_space<smem>>
    %cst = arith.constant 0.000000e+00 : f32
    %2 = vector.broadcast %cst : f32 to vector<2x1024xf32>
    %3 = arith.cmpf oge, %0, %2 : vector<2x1024xf32>
    %4 = vector.broadcast %1 : f32 to vector<2x1024xf32>
    %5 = arith.mulf %0, %4 : vector<2x1024xf32>
    %6 = arith.select %3, %0, %5 : vector<2x1024xi1>, vector<2x1024xf32>
    %c0_2 = arith.constant 0 : index
    %c0_3 = arith.constant 0 : index
    %7 = vector.load %arg3[%c0_2, %c0_3] : memref<2x1024xf32, #tpu.memory_space<vmem>>, vector<2x1024xf32>
    tpu.vector_store %arg3[%c0_2, %c0_3], %6 {strides = array<i32>} : memref<2x1024xf32, #tpu.memory_space<vmem>>, vector<2x1024xf32>,
    return
  }
  func.func @transform_0(%arg0: i32) -> i32 {
    %c0_i32 = arith.constant 0 : i32
    %c0_i32_0 = arith.constant 0 : i32
    return %c0_i32 : i32
  }
  func.func @transform_1(%arg0: i32) -> (i32, i32) {
    %c0_i32 = arith.constant 0 : i32
    %c0_i32_0 = arith.constant 0 : i32
    return %arg0, %c0_i32 : i32, i32
  }
  func.func @transform_2(%arg0: i32) -> (i32, i32) {
    %c0_i32 = arith.constant 0 : i32
    %c0_i32_0 = arith.constant 0 : i32
    return %arg0, %c0_i32 : i32, i32
  }
}

</mosaic_0001>

<llo_original>
// kernel: tpu_custom_call.1
$region0: #{tpu_custom_call.1}
  #allocation0 [shape = 'u32[]', space=smem, size = 0x4, offset = 0x4, fixed_abs, tag = 'smem constant byte address 0x4 - core index']
  #allocation1 [shape = 'u32[144,128]{1,0:T(1,128)}', space=vmem, size = 0x12000, scoped, tag = 'internal scratch']
  #allocation2 [shape = 'f32[1]{0:T(128)S(6)}', space=smem, size = 0x200, scoped, tag = 'scoped memory for tpu_custom_call.1']
  %s0 = inlined_call_operand.<no memory space> [shape: f32[1], index: 0, kind: input, shape index: {}]
  %s1 = inlined_call_operand.hbm [shape: f32[2,1024], index: 1, kind: input, shape index: {}]
  %s2 = inlined_call_operand.hbm [shape: f32[2,1024], index: 2, kind: output, shape index: {}]
  %s3 = sld [smem:[#allocation0]]
  $region22: #{tpu_custom_call.1} parent=0
    _
  %s5 = ssub.s32 1, %s3
  %s6 = scalar_select 0, %s5, %s3
  %7 = sst [smem:[#allocation2]] %s0
  $region1: #{tpu_custom_call.1} parent=0
    #allocation3 [shape = 'u8[8192]{0}', space=vmem, size = 0x2000, scoped, tag = 'input window, operand 1, single buffered']
    #allocation4 [shape = 's32[1]{0}', space=sflag, size = 0x4, scoped, tag = 'scoped memory for tpu_custom_call.1']
    #allocation5 [shape = 's32[1]{0}', space=sflag, size = 0x4, scoped, tag = 'scoped memory for tpu_custom_call.1']
    #allocation6 [shape = 'u8[8192]{0}', space=vmem, size = 0x2000, scoped, tag = 'output window, operand 0, single buffered']
    %8 = vsyncpa [#allocation4], 0
    %9 = vsyncpa [#allocation5], 0
    // Predicated region
    $region2: #{tpu_custom_call.1} parent=1 // pred_check
      _
    $region3: #{tpu_custom_call.1} parent=1 // pred_check_branch
      %11 = sbr.rel (0) target = $region5
    $region4: #{tpu_custom_call.1} parent=1 // pred_region
      _
    $region5: #{tpu_custom_call.1} parent=1 // pred_fallthru
      _
    // Predicated region
    $region6: #{tpu_custom_call.1} parent=1 // pred_check
      _
    $region7: #{tpu_custom_call.1} parent=1 // pred_check_branch
      %13 = sbr.rel (0) target = $region9
    $region8: #{tpu_custom_call.1} parent=1 // pred_region
      %s15 = ssub.s32 256, 256
      %16 = vsyncadd [#allocation4], %s15
      %s18 = sshll.u32 [#allocation3], 4
      %s19 = int_to_ptr.vmem [resolvable:$true] %s18
      %21 = dma.hbm_to_vmem [thread:$0]  %s1, 256, %s19, [#allocation4]
    $region9: #{tpu_custom_call.1} parent=1 // pred_fallthru
      _
    // Predicated region
    $region10: #{tpu_custom_call.1} parent=1 // pred_check
      _
    $region11: #{tpu_custom_call.1} parent=1 // pred_check_branch
      %23 = sbr.rel (0) target = $region13
    $region12: #{tpu_custom_call.1} parent=1 // pred_region
      %24 = dma.done [#allocation4], 256
    $region13: #{tpu_custom_call.1} parent=1 // pred_fallthru
      _
    %v25 = vld [vmem:[#allocation3] sm:$0xff]
    %v26 = vld [vmem:[#allocation3 + $0x8] sm:$0xff]
    %s27 = sld [smem:[#allocation2]]
    %vm28 = vcmp.ge.f32.partialorder %v25, 0.0
    %vm29 = vcmp.ge.f32.partialorder %v26, 0.0
    %v30 = vstv %s27
    %v31 = vmul.f32 %v25, %v30
    %v32 = vmul.f32 %v26, %v30
    %v33 = vsel %vm28, %v25, %v31
    %v34 = vsel %vm29, %v26, %v32
    %35 = vst [vmem:[#allocation6] sm:$0xff] %v33
    %36 = vst [vmem:[#allocation6 + $0x8] sm:$0xff] %v34
    // Predicated region
    $region14: #{tpu_custom_call.1} parent=1 // pred_check
      _
    $region15: #{tpu_custom_call.1} parent=1 // pred_check_branch
      %38 = sbr.rel (0) target = $region17
    $region16: #{tpu_custom_call.1} parent=1 // pred_region
      %s40 = ssub.s32 256, 256
      %41 = vsyncadd [#allocation5], %s40
      %s43 = sshll.u32 [#allocation6], 4
      %s44 = int_to_ptr.vmem [resolvable:$true] %s43
      %46 = dma.vmem_to_hbm [thread:$0]  %s44, 256, %s2, [#allocation5]
    $region17: #{tpu_custom_call.1} parent=1 // pred_fallthru
      _
    // Predicated region
    $region18: #{tpu_custom_call.1} parent=1 // pred_check
      _
    $region19: #{tpu_custom_call.1} parent=1 // pred_check_branch
      %48 = sbr.rel (0) target = $region21
    $region20: #{tpu_custom_call.1} parent=1 // pred_region
      %49 = dma.done [#allocation5], 256
    $region21: #{tpu_custom_call.1} parent=1 // pred_fallthru
      _
    %50 = vsyncpa [#allocation4], 1
    %51 = vsyncpa [#allocation5], 1

</llo_original>
